<compile_context>
chip_gen: v7x
topology: tpu7x:2x2x1
jax: 0.10.0
libtpu: 0.0.40
codegen_flags: <defaults>
</compile_context>

<pallas_src>
import functools

import jax
import jax.numpy as jnp
from jax.experimental import pallas as pl
from jax.experimental.pallas import tpu as pltpu


def _block_kernel(x_ref, gamma_ref, beta_ref,
                  whe_ref, bhe_ref,
                  wi_ref, bi_ref,
                  wo_ref, bo_ref,
                  out_ref, *, input_dim):
    D = input_dim
    # x = [h_in | time_emb] along the lane (feature) axis: [TB, D+T], f32.
    x = x_ref[...].astype(jnp.float32)
    h_in = x[:, :D]                                   # residual branch, [TB, D]

    # --- LayerNorm over the first D lanes only (masked), eps = 1e-5 ---
    lane = jax.lax.broadcasted_iota(jnp.int32, x.shape, dimension=1)
    h_mask = lane < D
    inv_d = 1.0 / D
    mean = jnp.sum(jnp.where(h_mask, x, 0.0), axis=-1, keepdims=True) * inv_d
    centered = x - mean
    var = jnp.sum(jnp.where(h_mask, centered * centered, 0.0),
                  axis=-1, keepdims=True) * inv_d
    # gamma/beta are zero-padded to [1, D+T]; tail lanes are replaced below.
    normed = centered * jax.lax.rsqrt(var + 1e-5) * gamma_ref[...] + beta_ref[...]

    # --- SiLU on the normalized h lanes; time_emb lanes pass through raw ---
    silu = normed * jax.nn.sigmoid(normed)
    fused = jnp.where(h_mask, silu, x)                # [silu(LN(h)) | t_emb]

    # --- fused layer_h + layer_emb: one MXU push, bf16 operands, f32 accum ---
    h = jnp.dot(fused.astype(jnp.bfloat16), whe_ref[...],
                preferred_element_type=jnp.float32) + bhe_ref[...]
    h = h * jax.nn.sigmoid(h)                         # SiLU (f32, EUP+VPU)

    # --- layer_int: [TB, W] @ [W, W] ---
    h = jnp.dot(h.astype(jnp.bfloat16), wi_ref[...],
                preferred_element_type=jnp.float32) + bi_ref[...]
    h = h * jax.nn.sigmoid(h)                         # SiLU (f32)

    # --- layer_out: [TB, W] @ [W, D] ---
    h = jnp.dot(h.astype(jnp.bfloat16), wo_ref[...],
                preferred_element_type=jnp.float32) + bo_ref[...]

    # --- residual (f32 accumulation, cast only at the store) ---
    # TODO(synk): for very large B with small D, present the output as a
    # lane-dense [B*D/128, 128] slab to turn masked vst.msk into unmasked vst.
    out_ref[...] = (h_in + h).astype(out_ref.dtype)


def block_forward(h_in, time_emb, kparams, *, tile_b=256):
    """Block forward as a batch-tiled Pallas kernel with VMEM-resident weights."""
    B, D = h_in.shape
    T = time_emb.shape[-1]
    W = kparams["wi"].shape[0]

    tile_b = min(tile_b, B)
    assert B % tile_b == 0, "batch must be divisible by the batch tile"
    assert tile_b % 8 == 0 or tile_b == B, "batch tile must be a multiple of 8"

    # Single activation operand: [h_in | time_emb] along the feature axis.
    x = jnp.concatenate([h_in, time_emb.astype(h_in.dtype)], axis=-1)

    def row_map(i):      # activation / output tiles march over the batch
        return (i, 0)

    def const_map(i):    # weights & biases: same block every step -> resident
        return (0, 0)

    kernel = functools.partial(_block_kernel, input_dim=D)
    return pl.pallas_call(
        kernel,
        out_shape=jax.ShapeDtypeStruct((B, D), h_in.dtype),
        grid=(B // tile_b,),
        in_specs=[
            pl.BlockSpec((tile_b, D + T), row_map),     # x = [h_in | t_emb]
            pl.BlockSpec((1, D + T), const_map),        # gamma (zero-padded)
            pl.BlockSpec((1, D + T), const_map),        # beta  (zero-padded)
            pl.BlockSpec((D + T, W), const_map),        # fused layer_h/emb W (bf16)
            pl.BlockSpec((1, W), const_map),            # fused bias bh + be
            pl.BlockSpec((W, W), const_map),            # layer_int W (bf16)
            pl.BlockSpec((1, W), const_map),            # layer_int b
            pl.BlockSpec((W, D), const_map),            # layer_out W (bf16)
            pl.BlockSpec((1, D), const_map),            # layer_out b
        ],
        out_specs=pl.BlockSpec((tile_b, D), row_map),
        compiler_params=pltpu.CompilerParams(
            dimension_semantics=("parallel",)),         # megacore on v7x
    )(x, kparams["gamma"], kparams["beta"],
      kparams["whe"], kparams["bhe"],
      kparams["wi"], kparams["bi"],
      kparams["wo"], kparams["bo"])


def init_params(key, input_dim, time_emb_dim, widen, dtype=jnp.float32):
    """f32 module parameters with shapes matching the nn.Module (pre-transposed)."""
    wide_dim = input_dim * widen
    keys = jax.random.split(key, 8)

    def lin(kw, kb, fan_in, fan_out):
        # PyTorch Linear stores [out, in]; we pre-transpose to [in, out].
        bound = float(fan_in) ** -0.5
        w = jax.random.uniform(kw, (fan_in, fan_out), dtype, -bound, bound)
        b = jax.random.uniform(kb, (1, fan_out), dtype, -bound, bound)
        return w, b

    wh, bh = lin(keys[0], keys[1], input_dim, wide_dim)       # layer_h
    we, be = lin(keys[2], keys[3], time_emb_dim, wide_dim)    # layer_emb
    wi, bi = lin(keys[4], keys[5], wide_dim, wide_dim)        # layer_int
    wo, bo = lin(keys[6], keys[7], wide_dim, input_dim)       # layer_out

    return {
        "gamma": jnp.ones((1, input_dim), dtype),   # nn.LayerNorm default weight
        "beta": jnp.zeros((1, input_dim), dtype),   # nn.LayerNorm default bias
        "wh": wh, "bh": bh, "we": we, "be": be,
        "wi": wi, "bi": bi, "wo": wo, "bo": bo,
    }


def prepare_kernel_params(p, time_emb_dim):
    """Fuse layer_h/layer_emb, pad LN affine, and cast matmul weights to bf16."""
    T = time_emb_dim
    f32 = jnp.float32
    return {
        "gamma": jnp.concatenate(
            [p["gamma"].astype(f32), jnp.zeros((1, T), f32)], axis=-1),
        "beta": jnp.concatenate(
            [p["beta"].astype(f32), jnp.zeros((1, T), f32)], axis=-1),
        "whe": jnp.concatenate([p["wh"], p["we"]], axis=0).astype(jnp.bfloat16),
        "bhe": (p["bh"] + p["be"]).astype(f32),
        "wi": p["wi"].astype(jnp.bfloat16), "bi": p["bi"].astype(f32),
        "wo": p["wo"].astype(jnp.bfloat16), "bo": p["bo"].astype(f32),
    }


def block_forward_ref(h_in, time_emb, p):
    """Pure-JAX f32 reference (exact nn.Module semantics, unfused weights)."""
    x = h_in.astype(jnp.float32)
    mean = jnp.mean(x, axis=-1, keepdims=True)
    var = jnp.mean(jnp.square(x - mean), axis=-1, keepdims=True)
    h = (x - mean) * jax.lax.rsqrt(var + 1e-5) * p["gamma"] + p["beta"]
    h = jax.nn.silu(h)
    h = h @ p["wh"] + p["bh"]
    h = h + (time_emb.astype(jnp.float32) @ p["we"] + p["be"])
    h = jax.nn.silu(h)
    h = h @ p["wi"] + p["bi"]
    h = jax.nn.silu(h)
    h = h @ p["wo"] + p["bo"]
    return (x + h).astype(h_in.dtype)


if __name__ == "__main__":
    key = jax.random.PRNGKey(0)
    k_h, k_t, k_p = jax.random.split(key, 3)

    batch = 64
    input_dim = 32
    time_emb_dim = 16
    widen = 4
    tile_b = 32          # multiple of 8 -> 2 grid steps, exercises the pipeline

    h_in = jax.random.normal(k_h, (batch, input_dim), jnp.float32)
    time_emb = jax.random.normal(k_t, (batch, time_emb_dim), jnp.float32)
    params = init_params(k_p, input_dim, time_emb_dim, widen)
    kparams = prepare_kernel_params(params, time_emb_dim)

    fwd = jax.jit(functools.partial(block_forward, tile_b=tile_b))
    out = jax.block_until_ready(fwd(h_in, time_emb, kparams))

    ref = block_forward_ref(h_in, time_emb, params)
    assert out.shape == (batch, input_dim)
    # bf16 weights vs f32 reference -> ~1e-2 relative error budget.
    assert jnp.allclose(out, ref, atol=3e-2, rtol=3e-2), (
        "mismatch vs f32 reference: max abs diff = "
        f"{float(jnp.max(jnp.abs(out - ref))):.3e}")

    print("KERNEL_OK")
</pallas_src>

<mosaic_0001>
module attributes {stable_mosaic.version = 11 : i64} {
  func.func @_block_kernel(%arg0: i32, %arg1: memref<32x48xf32, #tpu.memory_space<vmem>>, %arg2: memref<1x48xf32, #tpu.memory_space<vmem>>, %arg3: memref<1x48xf32, #tpu.memory_space<vmem>>, %arg4: memref<48x128xbf16, #tpu.memory_space<vmem>>, %arg5: memref<1x128xf32, #tpu.memory_space<vmem>>, %arg6: memref<128x128xbf16, #tpu.memory_space<vmem>>, %arg7: memref<1x128xf32, #tpu.memory_space<vmem>>, %arg8: memref<128x32xbf16, #tpu.memory_space<vmem>>, %arg9: memref<1x32xf32, #tpu.memory_space<vmem>>, %arg10: memref<32x32xf32, #tpu.memory_space<vmem>>) attributes {dimension_semantics = [#tpu.dimension_semantics<parallel>], iteration_bounds = array<i64: 2>, scalar_prefetch = 0 : i64, scratch_operands = 0 : i64, tpu.core_type = #tpu.core_type<tc>, window_params = [{transform_indices = @transform_0, window_bounds = array<i64: 32, 48>}, {pipeline_mode = #tpu.pipeline_mode<synchronous>, transform_indices = @transform_1, window_bounds = array<i64: 1, 48>}, {pipeline_mode = #tpu.pipeline_mode<synchronous>, transform_indices = @transform_2, window_bounds = array<i64: 1, 48>}, {pipeline_mode = #tpu.pipeline_mode<synchronous>, transform_indices = @transform_3, window_bounds = array<i64: 48, 128>}, {pipeline_mode = #tpu.pipeline_mode<synchronous>, transform_indices = @transform_4, window_bounds = array<i64: 1, 128>}, {pipeline_mode = #tpu.pipeline_mode<synchronous>, transform_indices = @transform_5, window_bounds = array<i64: 128, 128>}, {pipeline_mode = #tpu.pipeline_mode<synchronous>, transform_indices = @transform_6, window_bounds = array<i64: 1, 128>}, {pipeline_mode = #tpu.pipeline_mode<synchronous>, transform_indices = @transform_7, window_bounds = array<i64: 128, 32>}, {pipeline_mode = #tpu.pipeline_mode<synchronous>, transform_indices = @transform_8, window_bounds = array<i64: 1, 32>}, {transform_indices = @transform_9, window_bounds = array<i64: 32, 32>}]} {
    %c0 = arith.constant 0 : index
    %c0_0 = arith.constant 0 : index
    %0 = vector.load %arg1[%c0, %c0_0] : memref<32x48xf32, #tpu.memory_space<vmem>>, vector<32x48xf32>
    %1 = vector.extract_strided_slice %0 {offsets = [0, 0], sizes = [32, 32], strides = [1, 1]} : vector<32x48xf32> to vector<32x32xf32>
    %2 = tpu.iota {dimensions = array<i32: 1>} : vector<32x48xi32>
    %c32_i32 = arith.constant 32 : i32
    %3 = vector.broadcast %c32_i32 : i32 to vector<32x48xi32>
    %4 = arith.cmpi slt, %2, %3 : vector<32x48xi32>
    %cst = arith.constant 0.000000e+00 : f32
    %5 = vector.broadcast %cst : f32 to vector<32x48xf32>
    %6 = arith.select %4, %0, %5 : vector<32x48xi1>, vector<32x48xf32>
    %cst_1 = arith.constant dense<0.000000e+00> : vector<32xf32>
    %7 = vector.multi_reduction <add>, %6, %cst_1 [1] : vector<32x48xf32> to vector<32xf32>
    %8 = vector.shape_cast %7 : vector<32xf32> to vector<32x1xf32>
    %cst_2 = arith.constant 3.125000e-02 : f32
    %9 = vector.broadcast %cst_2 : f32 to vector<32x1xf32>
    %10 = arith.mulf %8, %9 : vector<32x1xf32>
    %11 = vector.broadcast %10 : vector<32x1xf32> to vector<32x48xf32>
    %12 = arith.subf %0, %11 : vector<32x48xf32>
    %13 = arith.mulf %12, %12 : vector<32x48xf32>
    %cst_3 = arith.constant 0.000000e+00 : f32
    %14 = vector.broadcast %cst_3 : f32 to vector<32x48xf32>
    %15 = arith.select %4, %13, %14 : vector<32x48xi1>, vector<32x48xf32>
    %cst_4 = arith.constant dense<0.000000e+00> : vector<32xf32>
    %16 = vector.multi_reduction <add>, %15, %cst_4 [1] : vector<32x48xf32> to vector<32xf32>
    %17 = vector.shape_cast %16 : vector<32xf32> to vector<32x1xf32>
    %cst_5 = arith.constant 3.125000e-02 : f32
    %18 = vector.broadcast %cst_5 : f32 to vector<32x1xf32>
    %19 = arith.mulf %17, %18 : vector<32x1xf32>
    %cst_6 = arith.constant 9.99999974E-6 : f32
    %20 = vector.broadcast %cst_6 : f32 to vector<32x1xf32>
    %21 = arith.addf %19, %20 : vector<32x1xf32>
    %22 = math.rsqrt %21 : vector<32x1xf32>
    %23 = vector.broadcast %22 : vector<32x1xf32> to vector<32x48xf32>
    %24 = arith.mulf %12, %23 : vector<32x48xf32>
    %c0_7 = arith.constant 0 : index
    %c0_8 = arith.constant 0 : index
    %25 = vector.load %arg2[%c0_7, %c0_8] : memref<1x48xf32, #tpu.memory_space<vmem>>, vector<1x48xf32>
    %26 = vector.broadcast %25 : vector<1x48xf32> to vector<32x48xf32>
    %27 = arith.mulf %24, %26 : vector<32x48xf32>
    %c0_9 = arith.constant 0 : index
    %c0_10 = arith.constant 0 : index
    %28 = vector.load %arg3[%c0_9, %c0_10] : memref<1x48xf32, #tpu.memory_space<vmem>>, vector<1x48xf32>
    %29 = vector.broadcast %28 : vector<1x48xf32> to vector<32x48xf32>
    %30 = arith.addf %27, %29 : vector<32x48xf32>
    %31 = arith.negf %30 : vector<32x48xf32>
    %32 = math.exp %31 : vector<32x48xf32>
    %cst_11 = arith.constant 1.000000e+00 : f32
    %33 = vector.broadcast %cst_11 : f32 to vector<32x48xf32>
    %34 = arith.addf %33, %32 : vector<32x48xf32>
    %35 = arith.divf %33, %34 : vector<32x48xf32>
    %36 = arith.mulf %30, %35 : vector<32x48xf32>
    %37 = arith.select %4, %36, %0 : vector<32x48xi1>, vector<32x48xf32>
    %38 = arith.truncf %37 : vector<32x48xf32> to vector<32x48xbf16>
    %c0_12 = arith.constant 0 : index
    %c0_13 = arith.constant 0 : index
    %39 = vector.load %arg4[%c0_12, %c0_13] : memref<48x128xbf16, #tpu.memory_space<vmem>>, vector<48x128xbf16>
    %cst_14 = arith.constant dense<0.000000e+00> : vector<32x128xf32>
    %40 = tpu.matmul %38, %39, %cst_14 {dimension_numbers = #tpu.dot_dimension_numbers<[1], [0], [0], [1], [0, 0, 1, 1], [], []>} : vector<32x48xbf16>, vector<48x128xbf16>, vector<32x128xf32> -> vector<32x128xf32>
    %c0_15 = arith.constant 0 : index
    %c0_16 = arith.constant 0 : index
    %41 = vector.load %arg5[%c0_15, %c0_16] : memref<1x128xf32, #tpu.memory_space<vmem>>, vector<1x128xf32>
    %42 = vector.broadcast %41 : vector<1x128xf32> to vector<32x128xf32>
    %43 = arith.addf %40, %42 : vector<32x128xf32>
    %44 = arith.negf %43 : vector<32x128xf32>
    %45 = math.exp %44 : vector<32x128xf32>
    %cst_17 = arith.constant 1.000000e+00 : f32
    %46 = vector.broadcast %cst_17 : f32 to vector<32x128xf32>
    %47 = arith.addf %46, %45 : vector<32x128xf32>
    %48 = arith.divf %46, %47 : vector<32x128xf32>
    %49 = arith.mulf %43, %48 : vector<32x128xf32>
    %50 = arith.truncf %49 : vector<32x128xf32> to vector<32x128xbf16>
    %c0_18 = arith.constant 0 : index
    %c0_19 = arith.constant 0 : index
    %51 = vector.load %arg6[%c0_18, %c0_19] : memref<128x128xbf16, #tpu.memory_space<vmem>>, vector<128x128xbf16>
    %cst_20 = arith.constant dense<0.000000e+00> : vector<32x128xf32>
    %52 = tpu.matmul %50, %51, %cst_20 {dimension_numbers = #tpu.dot_dimension_numbers<[1], [0], [0], [1], [0, 0, 1, 1], [], []>} : vector<32x128xbf16>, vector<128x128xbf16>, vector<32x128xf32> -> vector<32x128xf32>
    %c0_21 = arith.constant 0 : index
    %c0_22 = arith.constant 0 : index
    %53 = vector.load %arg7[%c0_21, %c0_22] : memref<1x128xf32, #tpu.memory_space<vmem>>, vector<1x128xf32>
    %54 = vector.broadcast %53 : vector<1x128xf32> to vector<32x128xf32>
    %55 = arith.addf %52, %54 : vector<32x128xf32>
    %56 = arith.negf %55 : vector<32x128xf32>
    %57 = math.exp %56 : vector<32x128xf32>
    %cst_23 = arith.constant 1.000000e+00 : f32
    %58 = vector.broadcast %cst_23 : f32 to vector<32x128xf32>
    %59 = arith.addf %58, %57 : vector<32x128xf32>
    %60 = arith.divf %58, %59 : vector<32x128xf32>
    %61 = arith.mulf %55, %60 : vector<32x128xf32>
    %62 = arith.truncf %61 : vector<32x128xf32> to vector<32x128xbf16>
    %c0_24 = arith.constant 0 : index
    %c0_25 = arith.constant 0 : index
    %63 = vector.load %arg8[%c0_24, %c0_25] : memref<128x32xbf16, #tpu.memory_space<vmem>>, vector<128x32xbf16>
    %cst_26 = arith.constant dense<0.000000e+00> : vector<32x32xf32>
    %64 = tpu.matmul %62, %63, %cst_26 {dimension_numbers = #tpu.dot_dimension_numbers<[1], [0], [0], [1], [0, 0, 1, 1], [], []>} : vector<32x128xbf16>, vector<128x32xbf16>, vector<32x32xf32> -> vector<32x32xf32>
    %c0_27 = arith.constant 0 : index
    %c0_28 = arith.constant 0 : index
    %65 = vector.load %arg9[%c0_27, %c0_28] : memref<1x32xf32, #tpu.memory_space<vmem>>, vector<1x32xf32>
    %66 = vector.broadcast %65 : vector<1x32xf32> to vector<32x32xf32>
    %67 = arith.addf %64, %66 : vector<32x32xf32>
    %68 = arith.addf %1, %67 : vector<32x32xf32>
    %c0_29 = arith.constant 0 : index
    %c0_30 = arith.constant 0 : index
    %69 = vector.load %arg10[%c0_29, %c0_30] : memref<32x32xf32, #tpu.memory_space<vmem>>, vector<32x32xf32>
    tpu.vector_store %arg10[%c0_29, %c0_30], %68 {strides = array<i32>} : memref<32x32xf32, #tpu.memory_space<vmem>>, vector<32x32xf32>,
    return
  }
  func.func @transform_0(%arg0: i32) -> (i32, i32) {
    %c0_i32 = arith.constant 0 : i32
    %c0_i32_0 = arith.constant 0 : i32
    return %arg0, %c0_i32 : i32, i32
  }
  func.func @transform_1(%arg0: i32) -> (i32, i32) {
    %c0_i32 = arith.constant 0 : i32
    %c0_i32_0 = arith.constant 0 : i32
    %c0_i32_1 = arith.constant 0 : i32
    return %c0_i32, %c0_i32_0 : i32, i32
  }
  func.func @transform_2(%arg0: i32) -> (i32, i32) {
    %c0_i32 = arith.constant 0 : i32
    %c0_i32_0 = arith.constant 0 : i32
    %c0_i32_1 = arith.constant 0 : i32
    return %c0_i32, %c0_i32_0 : i32, i32
  }
  func.func @transform_3(%arg0: i32) -> (i32, i32) {
    %c0_i32 = arith.constant 0 : i32
    %c0_i32_0 = arith.constant 0 : i32
    %c0_i32_1 = arith.constant 0 : i32
    return %c0_i32, %c0_i32_0 : i32, i32
  }
  func.func @transform_4(%arg0: i32) -> (i32, i32) {
    %c0_i32 = arith.constant 0 : i32
    %c0_i32_0 = arith.constant 0 : i32
    %c0_i32_1 = arith.constant 0 : i32
    return %c0_i32, %c0_i32_0 : i32, i32
  }
  func.func @transform_5(%arg0: i32) -> (i32, i32) {
    %c0_i32 = arith.constant 0 : i32
    %c0_i32_0 = arith.constant 0 : i32
    %c0_i32_1 = arith.constant 0 : i32
    return %c0_i32, %c0_i32_0 : i32, i32
  }
  func.func @transform_6(%arg0: i32) -> (i32, i32) {
    %c0_i32 = arith.constant 0 : i32
    %c0_i32_0 = arith.constant 0 : i32
    %c0_i32_1 = arith.constant 0 : i32
    return %c0_i32, %c0_i32_0 : i32, i32
  }
  func.func @transform_7(%arg0: i32) -> (i32, i32) {
    %c0_i32 = arith.constant 0 : i32
    %c0_i32_0 = arith.constant 0 : i32
    %c0_i32_1 = arith.constant 0 : i32
    return %c0_i32, %c0_i32_0 : i32, i32
  }
  func.func @transform_8(%arg0: i32) -> (i32, i32) {
    %c0_i32 = arith.constant 0 : i32
    %c0_i32_0 = arith.constant 0 : i32
    %c0_i32_1 = arith.constant 0 : i32
    return %c0_i32, %c0_i32_0 : i32, i32
  }
  func.func @transform_9(%arg0: i32) -> (i32, i32) {
    %c0_i32 = arith.constant 0 : i32
    %c0_i32_0 = arith.constant 0 : i32
    return %arg0, %c0_i32 : i32, i32
  }
}

</mosaic_0001>

<llo_original>
// kernel: block_forward.1
$region0: #{block_forward.1}
  #allocation0 [shape = 'u32[]', space=smem, size = 0x4, offset = 0x4, fixed_abs, tag = 'smem constant byte address 0x4 - core index']
  #allocation1 [shape = 'u32[144,128]{1,0:T(1,128)}', space=vmem, size = 0x12000, scoped, tag = 'internal scratch']
  %s0 = inlined_call_operand.vmem [shape: f32[64,48], index: 0, kind: input, shape index: {}]
  %s1 = inlined_call_operand.vmem [shape: f32[1,48], index: 1, kind: input, shape index: {}]
  %s2 = inlined_call_operand.vmem [shape: f32[1,48], index: 2, kind: input, shape index: {}]
  %s3 = inlined_call_operand.vmem [shape: bf16[48,128], index: 3, kind: input, shape index: {}]
  %s4 = inlined_call_operand.vmem [shape: f32[1,128], index: 4, kind: input, shape index: {}]
  %s5 = inlined_call_operand.vmem [shape: bf16[128,128], index: 5, kind: input, shape index: {}]
  %s6 = inlined_call_operand.vmem [shape: f32[1,128], index: 6, kind: input, shape index: {}]
  %s7 = inlined_call_operand.vmem [shape: bf16[128,32], index: 7, kind: input, shape index: {}]
  %s8 = inlined_call_operand.vmem [shape: f32[1,32], index: 8, kind: input, shape index: {}]
  %s9 = inlined_call_operand.vmem [shape: f32[64,32], index: 9, kind: output, shape index: {}]
  %s10 = sld [smem:[#allocation0]]
  $region69: #{block_forward.1} parent=0
    _
  %s12 = ssub.s32 1, %s10
  %s13 = scalar_select 0, %s12, %s10
  loop: start=0, step=1, limit=4
  $region2: #{block_forward.1} parent=0 // loop_pre_header
    _
  $region3: #{block_forward.1} parent=0 // loop_header
    %s15 = sphi 0, %s19
    %p16 = scmp.ge.s32.totalorder %s15, 4
    %s25 = sphi 0, %s27
    %s28 = sphi 0, %s25
    %s29 = sphi 0, %s28
    %s45 = sphi 0, %s29
    %s49 = sphi 0, %s49
    %s51 = sphi 0, %s49
    %s52 = sphi 0, %s51
    %s66 = sphi 0, %s52
    %s70 = sphi 0, %s70
    %s72 = sphi 0, %s70
    %s73 = sphi 0, %s72
    %s87 = sphi 0, %s73
    %s91 = sphi 0, %s91
    %s93 = sphi 0, %s91
    %s94 = sphi 0, %s93
    %s108 = sphi 0, %s94
    %s112 = sphi 0, %s112
    %s114 = sphi 0, %s112
    %s115 = sphi 0, %s114
    %s129 = sphi 0, %s115
    %s133 = sphi 0, %s133
    %s135 = sphi 0, %s133
    %s136 = sphi 0, %s135
    %s150 = sphi 0, %s136
    %s154 = sphi 0, %s154
    %s156 = sphi 0, %s154
    %s157 = sphi 0, %s156
    %s171 = sphi 0, %s157
    %s175 = sphi 0, %s175
    %s177 = sphi 0, %s175
    %s178 = sphi 0, %s177
    %s192 = sphi 0, %s178
    %s196 = sphi 0, %s196
    %s198 = sphi 0, %s196
    %s199 = sphi 0, %s198
    %s213 = sphi 0, %s199
    %s219 = sphi 0, %s221
    %s222 = sphi 0, %s219
    %s223 = sphi 0, %s222
    %s239 = sphi 0, %s223
  $region4: #{block_forward.1} parent=0 // loop_header_branch
    %18 = sbr.rel (%p16) target = $region8
  $region5: #{block_forward.1} parent=0 // loop_body
    %s20 = ssub.s32 %s15, 1
    %s21 = ssub.s32 %s15, 2
    %s22 = sadd.s32 %s15, 1
    %s23 = ssub.s32 %s15, %s22
    %p24 = scmp.eq.s32.totalorder %s23, 0
    %s26 = sadd.s32 %s25, 1
    %s27 = scalar_select %p24, %s25, %s26
    %p30 = pneg %p24
    %p31 = scmp.eq.s32.totalorder %s15, 1
    %p32 = por %p30, %p31
    %p33 = scmp.ne.s32.totalorder %s25, %s28
    %p34 = scmp.eq.s32.totalorder %s15, 0
    %p35 = por %p33, %p34
    %p36 = scmp.ne.s32.totalorder %s25, %s28
    %p37 = scmp.eq.s32.totalorder %s20, 1
    %p38 = por %p36, %p37
    %p39 = scmp.ne.s32.totalorder %s28, %s29
    %p40 = scmp.eq.s32.totalorder %s20, 0
    %p41 = por %p39, %p40
    %p42 = scmp.ne.s32.totalorder %s28, %s29
    %p43 = scmp.eq.s32.totalorder %s21, 1
    %p44 = por %p42, %p43
    %p46 = scmp.ne.s32.totalorder %s29, %s45
    %p47 = scmp.eq.s32.totalorder %s21, 0
    %p48 = por %p46, %p47
    %s50 = sadd.s32 %s49, 1
    %p53 = scmp.eq.s32.totalorder %s15, 1
    %p54 = scmp.ne.s32.totalorder %s49, %s51
    %p55 = scmp.eq.s32.totalorder %s15, 0
    %p56 = por %p54, %p55
    %p57 = scmp.ne.s32.totalorder %s49, %s51
    %p58 = scmp.eq.s32.totalorder %s20, 1
    %p59 = por %p57, %p58
    %p60 = scmp.ne.s32.totalorder %s51, %s52
    %p61 = scmp.eq.s32.totalorder %s20, 0
    %p62 = por %p60, %p61
    %p63 = scmp.ne.s32.totalorder %s51, %s52
    %p64 = scmp.eq.s32.totalorder %s21, 1
    %p65 = por %p63, %p64
    %p67 = scmp.ne.s32.totalorder %s52, %s66
    %p68 = scmp.eq.s32.totalorder %s21, 0
    %p69 = por %p67, %p68
    %s71 = sadd.s32 %s70, 1
    %p74 = scmp.eq.s32.totalorder %s15, 1
    %p75 = scmp.ne.s32.totalorder %s70, %s72
    %p76 = scmp.eq.s32.totalorder %s15, 0
    %p77 = por %p75, %p76
    %p78 = scmp.ne.s32.totalorder %s70, %s72
    %p79 = scmp.eq.s32.totalorder %s20, 1
    %p80 = por %p78, %p79
    %p81 = scmp.ne.s32.totalorder %s72, %s73
    %p82 = scmp.eq.s32.totalorder %s20, 0
    %p83 = por %p81, %p82
    %p84 = scmp.ne.s32.totalorder %s72, %s73
    %p85 = scmp.eq.s32.totalorder %s21, 1
    %p86 = por %p84, %p85
    %p88 = scmp.ne.s32.totalorder %s73, %s87
    %p89 = scmp.eq.s32.totalorder %s21, 0
    %p90 = por %p88, %p89
    %s92 = sadd.s32 %s91, 1
    %p95 = scmp.eq.s32.totalorder %s15, 1
    %p96 = scmp.ne.s32.totalorder %s91, %s93
    %p97 = scmp.eq.s32.totalorder %s15, 0
    %p98 = por %p96, %p97
    %p99 = scmp.ne.s32.totalorder %s91, %s93
    %p100 = scmp.eq.s32.totalorder %s20, 1
    %p101 = por %p99, %p100
    %p102 = scmp.ne.s32.totalorder %s93, %s94
    %p103 = scmp.eq.s32.totalorder %s20, 0
    %p104 = por %p102, %p103
    %p105 = scmp.ne.s32.totalorder %s93, %s94
    %p106 = scmp.eq.s32.totalorder %s21, 1
    %p107 = por %p105, %p106
    %p109 = scmp.ne.s32.totalorder %s94, %s108
    %p110 = scmp.eq.s32.totalorder %s21, 0
    %p111 = por %p109, %p110
    %s113 = sadd.s32 %s112, 1
    %p116 = scmp.eq.s32.totalorder %s15, 1
    %p117 = scmp.ne.s32.totalorder %s112, %s114
    %p118 = scmp.eq.s32.totalorder %s15, 0
    %p119 = por %p117, %p118
    %p120 = scmp.ne.s32.totalorder %s112, %s114
    %p121 = scmp.eq.s32.totalorder %s20, 1
    %p122 = por %p120, %p121
    %p123 = scmp.ne.s32.totalorder %s114, %s115
    %p124 = scmp.eq.s32.totalorder %s20, 0
    %p125 = por %p123, %p124
    %p126 = scmp.ne.s32.totalorder %s114, %s115
    %p127 = scmp.eq.s32.totalorder %s21, 1
    %p128 = por %p126, %p127
    %p130 = scmp.ne.s32.totalorder %s115, %s129
    %p131 = scmp.eq.s32.totalorder %s21, 0
    %p132 = por %p130, %p131
    %s134 = sadd.s32 %s133, 1
    %p137 = scmp.eq.s32.totalorder %s15, 1
    %p138 = scmp.ne.s32.totalorder %s133, %s135
    %p139 = scmp.eq.s32.totalorder %s15, 0
    %p140 = por %p138, %p139
    %p141 = scmp.ne.s32.totalorder %s133, %s135
    %p142 = scmp.eq.s32.totalorder %s20, 1
    %p143 = por %p141, %p142
    %p144 = scmp.ne.s32.totalorder %s135, %s136
    %p145 = scmp.eq.s32.totalorder %s20, 0
    %p146 = por %p144, %p145
    %p147 = scmp.ne.s32.totalorder %s135, %s136
    %p148 = scmp.eq.s32.totalorder %s21, 1
    %p149 = por %p147, %p148
    %p151 = scmp.ne.s32.totalorder %s136, %s150
    %p152 = scmp.eq.s32.totalorder %s21, 0
    %p153 = por %p151, %p152
    %s155 = sadd.s32 %s154, 1
    %p158 = scmp.eq.s32.totalorder %s15, 1
    %p159 = scmp.ne.s32.totalorder %s154, %s156
    %p160 = scmp.eq.s32.totalorder %s15, 0
    %p161 = por %p159, %p160
    %p162 = scmp.ne.s32.totalorder %s154, %s156
    %p163 = scmp.eq.s32.totalorder %s20, 1
    %p164 = por %p162, %p163
    %p165 = scmp.ne.s32.totalorder %s156, %s157
    %p166 = scmp.eq.s32.totalorder %s20, 0
    %p167 = por %p165, %p166
    %p168 = scmp.ne.s32.totalorder %s156, %s157
    %p169 = scmp.eq.s32.totalorder %s21, 1
    %p170 = por %p168, %p169
    %p172 = scmp.ne.s32.totalorder %s157, %s171
    %p173 = scmp.eq.s32.totalorder %s21, 0
    %p174 = por %p172, %p173
    %s176 = sadd.s32 %s175, 1
    %p179 = scmp.eq.s32.totalorder %s15, 1
    %p180 = scmp.ne.s32.totalorder %s175, %s177
    %p181 = scmp.eq.s32.totalorder %s15, 0
    %p182 = por %p180, %p181
    %p183 = scmp.ne.s32.totalorder %s175, %s177
    %p184 = scmp.eq.s32.totalorder %s20, 1
    %p185 = por %p183, %p184
    %p186 = scmp.ne.s32.totalorder %s177, %s178
    %p187 = scmp.eq.s32.totalorder %s20, 0
    %p188 = por %p186, %p187
    %p189 = scmp.ne.s32.totalorder %s177, %s178
    %p190 = scmp.eq.s32.totalorder %s21, 1
    %p191 = por %p189, %p190
    %p193 = scmp.ne.s32.totalorder %s178, %s192
    %p194 = scmp.eq.s32.totalorder %s21, 0
    %p195 = por %p193, %p194
    %s197 = sadd.s32 %s196, 1
    %p200 = scmp.eq.s32.totalorder %s15, 1
    %p201 = scmp.ne.s32.totalorder %s196, %s198
    %p202 = scmp.eq.s32.totalorder %s15, 0
    %p203 = por %p201, %p202
    %p204 = scmp.ne.s32.totalorder %s196, %s198
    %p205 = scmp.eq.s32.totalorder %s20, 1
    %p206 = por %p204, %p205
    %p207 = scmp.ne.s32.totalorder %s198, %s199
    %p208 = scmp.eq.s32.totalorder %s20, 0
    %p209 = por %p207, %p208
    %p210 = scmp.ne.s32.totalorder %s198, %s199
    %p211 = scmp.eq.s32.totalorder %s21, 1
    %p212 = por %p210, %p211
    %p214 = scmp.ne.s32.totalorder %s199, %s213
    %p215 = scmp.eq.s32.totalorder %s21, 0
    %p216 = por %p214, %p215
    %s217 = ssub.s32 %s15, %s22
    %p218 = scmp.eq.s32.totalorder %s217, 0
    %s220 = sadd.s32 %s219, 1
    %s221 = scalar_select %p218, %s219, %s220
    %p224 = pneg %p218
    %p225 = scmp.eq.s32.totalorder %s15, 1
    %p226 = por %p224, %p225
    %p227 = scmp.ne.s32.totalorder %s219, %s222
    %p228 = scmp.eq.s32.totalorder %s15, 0
    %p229 = por %p227, %p228
    %p230 = scmp.ne.s32.totalorder %s219, %s222
    %p231 = scmp.eq.s32.totalorder %s20, 1
    %p232 = por %p230, %p231
    %p233 = scmp.ne.s32.totalorder %s222, %s223
    %p234 = scmp.eq.s32.totalorder %s20, 0
    %p235 = por %p233, %p234
    %p236 = scmp.ne.s32.totalorder %s222, %s223
    %p237 = scmp.eq.s32.totalorder %s21, 1
    %p238 = por %p236, %p237
    %p240 = scmp.ne.s32.totalorder %s223, %s239
    %p241 = scmp.eq.s32.totalorder %s21, 0
    %p242 = por %p240, %p241
    %p243 = scmp.le.s32.totalorder 1, %s15
    %p244 = scmp.lt.s32.totalorder %s15, 3
    %p245 = pnand %p243, %p244
    %p246 = pneg %p245
    // Predicated region
    $region9: #{block_forward.1} parent=5 // pred_check
      _
    $region10: #{block_forward.1} parent=5 // pred_check_branch
      %248 = sbr.rel (%p245) target = $region12
    $region11: #{block_forward.1} parent=5 // pred_region
      %s249 = ssub.s32 %s15, 1
      // Predicated region
      $region13: #{block_forward.1} parent=11 // pred_check
        %p250 = pneg %p62
      $region14: #{block_forward.1} parent=11 // pred_check_branch
        %252 = sbr.rel (%p250) target = $region16
      $region15: #{block_forward.1} parent=11 // pred_region
        _
      $region16: #{block_forward.1} parent=11 // pred_fallthru
        _
      // Predicated region
      $region17: #{block_forward.1} parent=11 // pred_check
        %p253 = pneg %p83
      $region18: #{block_forward.1} parent=11 // pred_check_branch
        %255 = sbr.rel (%p253) target = $region20
      $region19: #{block_forward.1} parent=11 // pred_region
        _
      $region20: #{block_forward.1} parent=11 // pred_fallthru
        _
      // Predicated region
      $region21: #{block_forward.1} parent=11 // pred_check
        %p256 = pneg %p104
      $region22: #{block_forward.1} parent=11 // pred_check_branch
        %258 = sbr.rel (%p256) target = $region24
      $region23: #{block_forward.1} parent=11 // pred_region
        _
      $region24: #{block_forward.1} parent=11 // pred_fallthru
        _
      // Predicated region
      $region25: #{block_forward.1} parent=11 // pred_check
        %p259 = pneg %p125
      $region26: #{block_forward.1} parent=11 // pred_check_branch
        %261 = sbr.rel (%p259) target = $region28
      $region27: #{block_forward.1} parent=11 // pred_region
        _
      $region28: #{block_forward.1} parent=11 // pred_fallthru
        _
      // Predicated region
      $region29: #{block_forward.1} parent=11 // pred_check
        %p262 = pneg %p146
      $region30: #{block_forward.1} parent=11 // pred_check_branch
        %264 = sbr.rel (%p262) target = $region32
      $region31: #{block_forward.1} parent=11 // pred_region
        _
      $region32: #{block_forward.1} parent=11 // pred_fallthru
        _
      // Predicated region
      $region33: #{block_forward.1} parent=11 // pred_check
        %p265 = pneg %p167
      $region34: #{block_forward.1} parent=11 // pred_check_branch
        %267 = sbr.rel (%p265) target = $region36
      $region35: #{block_forward.1} parent=11 // pred_region
        _
      $region36: #{block_forward.1} parent=11 // pred_fallthru
        _
      // Predicated region
      $region37: #{block_forward.1} parent=11 // pred_check
        %p268 = pneg %p188
      $region38: #{block_forward.1} parent=11 // pred_check_branch
        %270 = sbr.rel (%p268) target = $region40
      $region39: #{block_forward.1} parent=11 // pred_region
        _
      $region40: #{block_forward.1} parent=11 // pred_fallthru
        _
      // Predicated region
      $region41: #{block_forward.1} parent=11 // pred_check
        %p271 = pneg %p209
      $region42: #{block_forward.1} parent=11 // pred_check_branch
        %273 = sbr.rel (%p271) target = $region44
      $region43: #{block_forward.1} parent=11 // pred_region
        _
      $region44: #{block_forward.1} parent=11 // pred_fallthru
        _
    $region12: #{block_forward.1} parent=5 // pred_fallthru
      _
    %p274 = scmp.lt.s32.totalorder %s15, 2
    // Predicated region
    $region45: #{block_forward.1} parent=5 // pred_check
      %p275 = pneg %p274
    $region46: #{block_forward.1} parent=5 // pred_check_branch
      %277 = sbr.rel (%p275) target = $region48
    $region47: #{block_forward.1} parent=5 // pred_region
      // Predicated region
      $region49: #{block_forward.1} parent=47 // pred_check
        %p278 = pneg %p35
      $region50: #{block_forward.1} parent=47 // pred_check_branch
        %280 = sbr.rel (%p278) target = $region52
      $region51: #{block_forward.1} parent=47 // pred_region
        %s281 = smul.u32 4, %s15
        %p282 = scmp.lt.s32.totalorder %s281, 7
        %s283 = scalar_select %p282, %s281, 7
        %s284 = smul.addr %s283, 8
        %s285 = scalar_lea.vmem %s0, %s284
        %s286 = smul.u32 4, %s15
      $region52: #{block_forward.1} parent=47 // pred_fallthru
        _
    $region48: #{block_forward.1} parent=5 // pred_fallthru
      _
    %p287 = scmp.le.s32.totalorder 1, %s15
    %p288 = scmp.lt.s32.totalorder %s15, 3
    %p289 = pnand %p287, %p288
    %p290 = pneg %p289
    // Predicated region
    $region53: #{block_forward.1} parent=5 // pred_check
      _
    $region54: #{block_forward.1} parent=5 // pred_check_branch
      %292 = sbr.rel (%p289) target = $region56
    $region55: #{block_forward.1} parent=5 // pred_region
      %s293 = ssub.s32 %s15, 1
      %s294 = smul.u32 4, %s20
      %p295 = scmp.lt.s32.totalorder %s294, 7
      %s296 = scalar_select %p295, %s294, 7
      %s297 = smul.addr %s296, 8
      %s298 = scalar_lea.vmem %s0, %s297
      %p299 = pneg %p41
      %p300 = pneg %p38
      %p301 = pneg %p62
      %p302 = pneg %p59
      %p303 = pneg %p83
      %p304 = pneg %p80
      %p305 = pneg %p104
      %p306 = pneg %p101
      %p307 = pneg %p125
      %p308 = pneg %p122
      %p309 = pneg %p146
      %p310 = pneg %p143
      %p311 = pneg %p167
      %p312 = pneg %p164
      %p313 = pneg %p188
      %p314 = pneg %p185
      %p315 = pneg %p209
      %p316 = pneg %p206
      %p317 = pneg %p235
      %p318 = pneg %p232
      %s319 = smul.u32 4, %s20
      %p320 = scmp.lt.s32.totalorder %s319, 7
      %s321 = scalar_select %p320, %s319, 7
      %s322 = smul.addr %s321, 8
      %s323 = scalar_lea.vmem %s9, %s322
      %s324 = smul.u32 4, %s20
      %p325 = scmp.lt.s32.totalorder %s324, 7
      %s326 = scalar_select %p325, %s324, 7
      %s327 = smul.addr %s326, 8
      %s328 = scalar_lea.vmem %s0, %s327
      %s329 = smul.u32 4, %s20
      %s330 = smul.u32 4, %s20
      %p331 = scmp.lt.s32.totalorder %s330, 7
      %s332 = scalar_select %p331, %s330, 7
      %s333 = smul.addr %s332, 8
      %s334 = scalar_lea.vmem %s9, %s333
      %s335 = smul.u32 4, %s20
      %v337 = vld [vmem:[%s328] sm:$0xff]
      %v338 = vld [vmem:[%s328 + $0x8] sm:$0xff]
      %v339 = vld [vmem:[%s328 + $0x10] sm:$0xff]
      %v340 = vld [vmem:[%s328 + $0x18] sm:$0xff]
      %v341 = vlaneseq
      %v342 = vand.u32 %v341, 127
      %vm343 = vcmp.lt.s32.totalorder %v342, 32
      %v344 = vsel %vm343, %v337, 0.0
      %v345 = vsel %vm343, %v338, 0.0
      %v346 = vsel %vm343, %v339, 0.0
      %v347 = vsel %vm343, %v340, 0.0
      %vm348 = vcmask 392192
      %v349 = vsel %vm348, %v344, 0.0
      %350 = vadd.xlane.f32.xlu0 %v349
      %v351 = vpop.xlane.xlu0 %350
      %v352 = vsel %vm348, %v345, 0.0
      %353 = vadd.xlane.f32.xlu0 %v352
      %v354 = vpop.xlane.xlu0 %353
      %v355 = vsel %vm348, %v346, 0.0
      %356 = vadd.xlane.f32.xlu0 %v355
      %v357 = vpop.xlane.xlu0 %356
      %v358 = vsel %vm348, %v347, 0.0
      %359 = vadd.xlane.f32.xlu0 %v358
      %v360 = vpop.xlane.xlu0 %359
      %v361 = vmul.f32 %v351, 0.03125
      %v362 = vmul.f32 %v354, 0.03125
      %v363 = vmul.f32 %v357, 0.03125
      %v364 = vmul.f32 %v360, 0.03125
      %v365 = vsub.f32 %v337, %v361
      %v366 = vsub.f32 %v338, %v362
      %v367 = vsub.f32 %v339, %v363
      %v368 = vsub.f32 %v340, %v364
      %v369 = vmul.f32 %v365, %v365
      %v370 = vmul.f32 %v366, %v366
      %v371 = vmul.f32 %v367, %v367
      %v372 = vmul.f32 %v368, %v368
      %v373 = vsel %vm343, %v369, 0.0
      %v374 = vsel %vm343, %v370, 0.0
      %v375 = vsel %vm343, %v371, 0.0
      %v376 = vsel %vm343, %v372, 0.0
      %v377 = vsel %vm348, %v373, 0.0
      %378 = vadd.xlane.f32.xlu0 %v377
      %v379 = vpop.xlane.xlu0 %378
      %v380 = vsel %vm348, %v374, 0.0
      %381 = vadd.xlane.f32.xlu0 %v380
      %v382 = vpop.xlane.xlu0 %381
      %v383 = vsel %vm348, %v375, 0.0
      %384 = vadd.xlane.f32.xlu0 %v383
      %v385 = vpop.xlane.xlu0 %384
      %v386 = vsel %vm348, %v376, 0.0
      %387 = vadd.xlane.f32.xlu0 %v386
      %v388 = vpop.xlane.xlu0 %387
      %v389 = vmul.f32 %v379, 0.03125
      %v390 = vmul.f32 %v382, 0.03125
      %v391 = vmul.f32 %v385, 0.03125
      %v392 = vmul.f32 %v388, 0.03125
      %v393 = vadd.f32 %v389, 1e-05
      %v394 = vadd.f32 %v390, 1e-05
      %v395 = vadd.f32 %v391, 1e-05
      %v396 = vadd.f32 %v392, 1e-05
      %v397 = vrsqrt.pop %v393
      %v398 = vrsqrt.pop %v394
      %v399 = vrsqrt.pop %v395
      %v400 = vrsqrt.pop %v396
      %v401 = vmul.f32 %v365, %v397
      %v402 = vmul.f32 %v366, %v398
      %v403 = vmul.f32 %v367, %v399
      %v404 = vmul.f32 %v368, %v400
      %v405 = vld [vmem:[%s1] sm:$0x1]
      %v407 = vlaneseq
      %v408 = vshrl.u32 %v407, 7
      %v409 = vsub.s32 0, %v408
      %v410 = vrot.slane %v405, %v409
      %v412 = vmul.f32 %v401, %v410
      %v413 = vmul.f32 %v402, %v410
      %v414 = vmul.f32 %v403, %v410
      %v415 = vmul.f32 %v404, %v410
      %v416 = vld [vmem:[%s2] sm:$0x1]
      %v418 = vlaneseq
      %v419 = vshrl.u32 %v418, 7
      %v420 = vsub.s32 0, %v419
      %v421 = vrot.slane %v416, %v420
      %v423 = vadd.f32 %v412, %v421
      %v424 = vadd.f32 %v413, %v421
      %v425 = vadd.f32 %v414, %v421
      %v426 = vadd.f32 %v415, %v421
      %v427 = vxor.u32 %v423, 2147483648
      %v428 = vxor.u32 %v424, 2147483648
      %v429 = vxor.u32 %v425, 2147483648
      %v430 = vxor.u32 %v426, 2147483648
      %v431 = vmul.f32 %v427, 1.442695
      %v432 = vpow.pop %v431
      %v433 = vmul.f32 %v428, 1.442695
      %v434 = vpow.pop %v433
      %v435 = vmul.f32 %v429, 1.442695
      %v436 = vpow.pop %v435
      %v437 = vmul.f32 %v430, 1.442695
      %v438 = vpow.pop %v437
      %v439 = vadd.f32 %v432, 1.0
      %v440 = vadd.f32 %v434, 1.0
      %v441 = vadd.f32 %v436, 1.0
      %v442 = vadd.f32 %v438, 1.0
      %v443 = vrcp.pop %v439
      %v444 = vmul.f32 1.0, %v443
      %v445 = vrcp.pop %v440
      %v446 = vmul.f32 1.0, %v445
      %v447 = vrcp.pop %v441
      %v448 = vmul.f32 1.0, %v447
      %v449 = vrcp.pop %v442
      %v450 = vmul.f32 1.0, %v449
      %v451 = vmul.f32 %v423, %v444
      %v452 = vmul.f32 %v424, %v446
      %v453 = vmul.f32 %v425, %v448
      %v454 = vmul.f32 %v426, %v450
      %v455 = vsel %vm343, %v451, %v337
      %v456 = vsel %vm343, %v452, %v338
      %v457 = vsel %vm343, %v453, %v339
      %v458 = vsel %vm343, %v454, %v340
      %v459 = vpack.c.bf16 %v456, %v455
      %v460 = vpack.c.bf16 %v458, %v457
      %v461 = vld [vmem:[%s3] sm:$0xf]
      %v462 = vld [vmem:[%s3 + $0x4] sm:$0xf]
      %v463 = vld [vmem:[%s3 + $0x8] sm:$0xf]
      %v464 = vld [vmem:[%s3 + $0xc] sm:$0xf]
      %v465 = vld [vmem:[%s3 + $0x10] sm:$0xf]
      %v466 = vld [vmem:[%s3 + $0x14] sm:$0xf]
      %v467 = vld [vmem:[%s4] sm:$0x1]
      %v469 = vlaneseq
      %v470 = vshrl.u32 %v469, 7
      %v471 = vsub.s32 0, %v470
      %v472 = vrot.slane %v467, %v471
      %v480 = vunpack.c.l.b16 %v461
      %v481 = vunpack.c.l.b16 %v462
      %v482 = vunpack.c.l.b16 %v463
      %v483 = vunpack.c.l.b16 %v464
      %v484 = vunpack.c.l.b16 %v465
      %v485 = vunpack.c.l.b16 %v466
      %v486 = vpack.c.b16 %v481, %v480
      %v487 = vpack.c.b16 %v483, %v482
      %v488 = vpack.c.b16 %v485, %v484
      %v493 = vsel %vm348, %v459, 0
      %v496 = vsel %vm348, %v460, 0
      %498 = vmatprep.subr.bf16.mxu0 0
      %499 = vmatpush1.bf16.msra.mxu0 %v486
      %500 = vmatprep.subr.bf16.mxu0 0
      %501 = vmatpush1.bf16.msra.mxu0 %v487
      %502 = vmatprep.subr.bf16.mxu0 0
      %503 = vmatpush1.bf16.msra.mxu0 %v488
      %504 = vmatprep.subr.bf16.mxu0 0
      %505 = vmatpush1.bf16.msra.mxu0 0
      %506 = vmatprep.subr.bf16.mxu0 0
      %507 = vmatpush1.bf16.msra.mxu0 0
      %508 = vmatprep.subr.bf16.mxu0 0
      %509 = vmatpush1.bf16.msra.mxu0 0
      %510 = vmatprep.subr.bf16.mxu0 0
      %511 = vmatpush1.bf16.msra.mxu0 0
      %512 = vmatprep.subr.bf16.mxu0 0
      %513 = vmatpush1.bf16.msra.mxu0 0
      %514 = vmatprep.subr.bf16.mxu0 0
      %515 = vmatpush1.bf16.msra.mxu0 0
      %516 = vmatprep.subr.bf16.mxu0 0
      %517 = vmatpush1.bf16.msra.mxu0 0
      %518 = vmatprep.subr.bf16.mxu0 0
      %519 = vmatpush1.bf16.msra.mxu0 0
      %520 = vmatprep.subr.bf16.mxu0 0
      %521 = vmatpush1.bf16.msra.mxu0 0
      %522 = vmatprep.subr.bf16.mxu0 0
      %523 = vmatpush1.bf16.msra.mxu0 0
      %524 = vmatprep.subr.bf16.mxu0 0
      %525 = vmatpush1.bf16.msra.mxu0 0
      %526 = vmatprep.subr.bf16.mxu0 0
      %527 = vmatpush1.bf16.msra.mxu0 0
      %528 = vmatprep.subr.bf16.mxu0 0
      %529 = vmatpush1.bf16.msra.mxu0 0
      %530 = vmatprep.mubr.bf16.mxu0 0
      %531 = vmatmul.mubr.bf16.gmra.mrb[0].mxu0 %v493
      %v532 = vpop.f32.mrb[0].mxu0
      %v533 = vadd.f32 %v472, %v532
      %v534 = vpop.f32.mrb[0].mxu0
      %v535 = vpop.f32.mrb[0].mxu0
      %v536 = vadd.f32 %v472, %v535
      %v537 = vpop.f32.mrb[0].mxu0
      %538 = vmatprep.mubr.bf16.mxu0 0
      %539 = vmatmul.mubr.bf16.gmra.mrb[0].mxu0 %v496
      %v540 = vpop.f32.mrb[0].mxu0
      %v541 = vadd.f32 %v472, %v540
      %v542 = vpop.f32.mrb[0].mxu0
      %v543 = vpop.f32.mrb[0].mxu0
      %v544 = vadd.f32 %v472, %v543
      %v545 = vpop.f32.mrb[0].mxu0
      %546 = vdwg.mxu0
      %v547 = vxor.u32 %v533, 2147483648
      %v548 = vxor.u32 %v536, 2147483648
      %v549 = vxor.u32 %v541, 2147483648
      %v550 = vxor.u32 %v544, 2147483648
      %v551 = vmul.f32 %v547, 1.442695
      %v552 = vpow.pop %v551
      %v553 = vmul.f32 %v548, 1.442695
      %v554 = vpow.pop %v553
      %v555 = vmul.f32 %v549, 1.442695
      %v556 = vpow.pop %v555
      %v557 = vmul.f32 %v550, 1.442695
      %v558 = vpow.pop %v557
      %v559 = vadd.f32 %v552, 1.0
      %v560 = vadd.f32 %v554, 1.0
      %v561 = vadd.f32 %v556, 1.0
      %v562 = vadd.f32 %v558, 1.0
      %v563 = vrcp.pop %v559
      %v564 = vmul.f32 1.0, %v563
      %v565 = vrcp.pop %v560
      %v566 = vmul.f32 1.0, %v565
      %v567 = vrcp.pop %v561
      %v568 = vmul.f32 1.0, %v567
      %v569 = vrcp.pop %v562
      %v570 = vmul.f32 1.0, %v569
      %v571 = vmul.f32 %v533, %v564
      %v572 = vmul.f32 %v536, %v566
      %v573 = vmul.f32 %v541, %v568
      %v574 = vmul.f32 %v544, %v570
      %v575 = vpack.c.bf16 %v572, %v571
      %v576 = vpack.c.bf16 %v574, %v573
      %v577 = vld [vmem:[%s5] sm:$0xf]
      %v578 = vld [vmem:[%s5 + $0x4] sm:$0xf]
      %v579 = vld [vmem:[%s5 + $0x8] sm:$0xf]
      %v580 = vld [vmem:[%s5 + $0xc] sm:$0xf]
      %v581 = vld [vmem:[%s5 + $0x10] sm:$0xf]
      %v582 = vld [vmem:[%s5 + $0x14] sm:$0xf]
      %v583 = vld [vmem:[%s5 + $0x18] sm:$0xf]
      %v584 = vld [vmem:[%s5 + $0x1c] sm:$0xf]
      %v585 = vld [vmem:[%s5 + $0x20] sm:$0xf]
      %v586 = vld [vmem:[%s5 + $0x24] sm:$0xf]
      %v587 = vld [vmem:[%s5 + $0x28] sm:$0xf]
      %v588 = vld [vmem:[%s5 + $0x2c] sm:$0xf]
      %v589 = vld [vmem:[%s5 + $0x30] sm:$0xf]
      %v590 = vld [vmem:[%s5 + $0x34] sm:$0xf]
      %v591 = vld [vmem:[%s5 + $0x38] sm:$0xf]
      %v592 = vld [vmem:[%s5 + $0x3c] sm:$0xf]
      %v593 = vld [vmem:[%s6] sm:$0x1]
      %v595 = vlaneseq
      %v596 = vshrl.u32 %v595, 7
      %v597 = vsub.s32 0, %v596
      %v598 = vrot.slane %v593, %v597
      %v616 = vunpack.c.l.b16 %v577
      %v617 = vunpack.c.l.b16 %v578
      %v618 = vunpack.c.l.b16 %v579
      %v619 = vunpack.c.l.b16 %v580
      %v620 = vunpack.c.l.b16 %v581
      %v621 = vunpack.c.l.b16 %v582
      %v622 = vunpack.c.l.b16 %v583
      %v623 = vunpack.c.l.b16 %v584
      %v624 = vunpack.c.l.b16 %v585
      %v625 = vunpack.c.l.b16 %v586
      %v626 = vunpack.c.l.b16 %v587
      %v627 = vunpack.c.l.b16 %v588
      %v628 = vunpack.c.l.b16 %v589
      %v629 = vunpack.c.l.b16 %v590
      %v630 = vunpack.c.l.b16 %v591
      %v631 = vunpack.c.l.b16 %v592
      %v632 = vpack.c.b16 %v617, %v616
      %v633 = vpack.c.b16 %v619, %v618
      %v634 = vpack.c.b16 %v621, %v620
      %v635 = vpack.c.b16 %v623, %v622
      %v636 = vpack.c.b16 %v625, %v624
      %v637 = vpack.c.b16 %v627, %v626
      %v638 = vpack.c.b16 %v629, %v628
      %v639 = vpack.c.b16 %v631, %v630
      %648 = vmatprep.subr.bf16.mxu0 0
      %649 = vmatpush1.bf16.msra.mxu0 %v632
      %650 = vmatprep.subr.bf16.mxu0 0
      %651 = vmatpush1.bf16.msra.mxu0 %v633
      %652 = vmatprep.subr.bf16.mxu0 0
      %653 = vmatpush1.bf16.msra.mxu0 %v634
      %654 = vmatprep.subr.bf16.mxu0 0
      %655 = vmatpush1.bf16.msra.mxu0 %v635
      %656 = vmatprep.subr.bf16.mxu0 0
      %657 = vmatpush1.bf16.msra.mxu0 %v636
      %658 = vmatprep.subr.bf16.mxu0 0
      %659 = vmatpush1.bf16.msra.mxu0 %v637
      %660 = vmatprep.subr.bf16.mxu0 0
      %661 = vmatpush1.bf16.msra.mxu0 %v638
      %662 = vmatprep.subr.bf16.mxu0 0
      %663 = vmatpush1.bf16.msra.mxu0 %v639
      %664 = vmatprep.subr.bf16.mxu0 0
      %665 = vmatpush1.bf16.msra.mxu0 0
      %666 = vmatprep.subr.bf16.mxu0 0
      %667 = vmatpush1.bf16.msra.mxu0 0
      %668 = vmatprep.subr.bf16.mxu0 0
      %669 = vmatpush1.bf16.msra.mxu0 0
      %670 = vmatprep.subr.bf16.mxu0 0
      %671 = vmatpush1.bf16.msra.mxu0 0
      %672 = vmatprep.subr.bf16.mxu0 0
      %673 = vmatpush1.bf16.msra.mxu0 0
      %674 = vmatprep.subr.bf16.mxu0 0
      %675 = vmatpush1.bf16.msra.mxu0 0
      %676 = vmatprep.subr.bf16.mxu0 0
      %677 = vmatpush1.bf16.msra.mxu0 0
      %678 = vmatprep.subr.bf16.mxu0 0
      %679 = vmatpush1.bf16.msra.mxu0 0
      %680 = vmatprep.mubr.bf16.mxu0 0
      %681 = vmatmul.mubr.bf16.gmra.mrb[0].mxu0 %v575
      %v682 = vpop.f32.mrb[0].mxu0
      %v683 = vadd.f32 %v598, %v682
      %v684 = vpop.f32.mrb[0].mxu0
      %v685 = vpop.f32.mrb[0].mxu0
      %v686 = vadd.f32 %v598, %v685
      %v687 = vpop.f32.mrb[0].mxu0
      %688 = vmatprep.mubr.bf16.mxu0 0
      %689 = vmatmul.mubr.bf16.gmra.mrb[0].mxu0 %v576
      %v690 = vpop.f32.mrb[0].mxu0
      %v691 = vadd.f32 %v598, %v690
      %v692 = vpop.f32.mrb[0].mxu0
      %v693 = vpop.f32.mrb[0].mxu0
      %v694 = vadd.f32 %v598, %v693
      %v695 = vpop.f32.mrb[0].mxu0
      %696 = vdwg.mxu0
      %v697 = vxor.u32 %v683, 2147483648
      %v698 = vxor.u32 %v686, 2147483648
      %v699 = vxor.u32 %v691, 2147483648
      %v700 = vxor.u32 %v694, 2147483648
      %v701 = vmul.f32 %v697, 1.442695
      %v702 = vpow.pop %v701
      %v703 = vmul.f32 %v698, 1.442695
      %v704 = vpow.pop %v703
      %v705 = vmul.f32 %v699, 1.442695
      %v706 = vpow.pop %v705
      %v707 = vmul.f32 %v700, 1.442695
      %v708 = vpow.pop %v707
      %v709 = vadd.f32 %v702, 1.0
      %v710 = vadd.f32 %v704, 1.0
      %v711 = vadd.f32 %v706, 1.0
      %v712 = vadd.f32 %v708, 1.0
      %v713 = vrcp.pop %v709
      %v714 = vmul.f32 1.0, %v713
      %v715 = vrcp.pop %v710
      %v716 = vmul.f32 1.0, %v715
      %v717 = vrcp.pop %v711
      %v718 = vmul.f32 1.0, %v717
      %v719 = vrcp.pop %v712
      %v720 = vmul.f32 1.0, %v719
      %v721 = vmul.f32 %v683, %v714
      %v722 = vmul.f32 %v686, %v716
      %v723 = vmul.f32 %v691, %v718
      %v724 = vmul.f32 %v694, %v720
      %v725 = vpack.c.bf16 %v722, %v721
      %v726 = vpack.c.bf16 %v724, %v723
      %v727 = vld [vmem:[%s7] sm:$0xf]
      %v728 = vld [vmem:[%s7 + $0x4] sm:$0xf]
      %v729 = vld [vmem:[%s7 + $0x8] sm:$0xf]
      %v730 = vld [vmem:[%s7 + $0xc] sm:$0xf]
      %v731 = vld [vmem:[%s7 + $0x10] sm:$0xf]
      %v732 = vld [vmem:[%s7 + $0x14] sm:$0xf]
      %v733 = vld [vmem:[%s7 + $0x18] sm:$0xf]
      %v734 = vld [vmem:[%s7 + $0x1c] sm:$0xf]
      %v735 = vld [vmem:[%s7 + $0x20] sm:$0xf]
      %v736 = vld [vmem:[%s7 + $0x24] sm:$0xf]
      %v737 = vld [vmem:[%s7 + $0x28] sm:$0xf]
      %v738 = vld [vmem:[%s7 + $0x2c] sm:$0xf]
      %v739 = vld [vmem:[%s7 + $0x30] sm:$0xf]
      %v740 = vld [vmem:[%s7 + $0x34] sm:$0xf]
      %v741 = vld [vmem:[%s7 + $0x38] sm:$0xf]
      %v742 = vld [vmem:[%s7 + $0x3c] sm:$0xf]
      %v743 = vld [vmem:[%s8] sm:$0x1]
      %v745 = vlaneseq
      %v746 = vshrl.u32 %v745, 7
      %v747 = vsub.s32 0, %v746
      %v748 = vrot.slane %v743, %v747
      %v766 = vunpack.c.l.b16 %v727
      %v767 = vunpack.c.l.b16 %v728
      %v768 = vunpack.c.l.b16 %v729
      %v769 = vunpack.c.l.b16 %v730
      %v770 = vunpack.c.l.b16 %v731
      %v771 = vunpack.c.l.b16 %v732
      %v772 = vunpack.c.l.b16 %v733
      %v773 = vunpack.c.l.b16 %v734
      %v774 = vunpack.c.l.b16 %v735
      %v775 = vunpack.c.l.b16 %v736
      %v776 = vunpack.c.l.b16 %v737
      %v777 = vunpack.c.l.b16 %v738
      %v778 = vunpack.c.l.b16 %v739
      %v779 = vunpack.c.l.b16 %v740
      %v780 = vunpack.c.l.b16 %v741
      %v781 = vunpack.c.l.b16 %v742
      %v782 = vpack.c.b16 %v767, %v766
      %v783 = vpack.c.b16 %v769, %v768
      %v784 = vpack.c.b16 %v771, %v770
      %v785 = vpack.c.b16 %v773, %v772
      %v786 = vpack.c.b16 %v775, %v774
      %v787 = vpack.c.b16 %v777, %v776
      %v788 = vpack.c.b16 %v779, %v778
      %v789 = vpack.c.b16 %v781, %v780
      %798 = vmatprep.subr.bf16.mxu0 0
      %799 = vmatpush1.bf16.msra.mxu0 %v782
      %800 = vmatprep.subr.bf16.mxu0 0
      %801 = vmatpush1.bf16.msra.mxu0 %v783
      %802 = vmatprep.subr.bf16.mxu0 0
      %803 = vmatpush1.bf16.msra.mxu0 %v784
      %804 = vmatprep.subr.bf16.mxu0 0
      %805 = vmatpush1.bf16.msra.mxu0 %v785
      %806 = vmatprep.subr.bf16.mxu0 0
      %807 = vmatpush1.bf16.msra.mxu0 %v786
      %808 = vmatprep.subr.bf16.mxu0 0
      %809 = vmatpush1.bf16.msra.mxu0 %v787
      %810 = vmatprep.subr.bf16.mxu0 0
      %811 = vmatpush1.bf16.msra.mxu0 %v788
      %812 = vmatprep.subr.bf16.mxu0 0
      %813 = vmatpush1.bf16.msra.mxu0 %v789
      %814 = vmatprep.subr.bf16.mxu0 0
      %815 = vmatpush1.bf16.msra.mxu0 0
      %816 = vmatprep.subr.bf16.mxu0 0
      %817 = vmatpush1.bf16.msra.mxu0 0
      %818 = vmatprep.subr.bf16.mxu0 0
      %819 = vmatpush1.bf16.msra.mxu0 0
      %820 = vmatprep.subr.bf16.mxu0 0
      %821 = vmatpush1.bf16.msra.mxu0 0
      %822 = vmatprep.subr.bf16.mxu0 0
      %823 = vmatpush1.bf16.msra.mxu0 0
      %824 = vmatprep.subr.bf16.mxu0 0
      %825 = vmatpush1.bf16.msra.mxu0 0
      %826 = vmatprep.subr.bf16.mxu0 0
      %827 = vmatpush1.bf16.msra.mxu0 0
      %828 = vmatprep.subr.bf16.mxu0 0
      %829 = vmatpush1.bf16.msra.mxu0 0
      %830 = vmatprep.mubr.bf16.mxu0 0
      %831 = vmatmul.mubr.bf16.gmra.mrb[0].mxu0 %v725
      %v832 = vpop.f32.mrb[0].mxu0
      %v833 = vadd.f32 %v748, %v832
      %v834 = vpop.f32.mrb[0].mxu0
      %v835 = vpop.f32.mrb[0].mxu0
      %v836 = vadd.f32 %v748, %v835
      %v837 = vpop.f32.mrb[0].mxu0
      %838 = vmatprep.mubr.bf16.mxu0 0
      %839 = vmatmul.mubr.bf16.gmra.mrb[0].mxu0 %v726
      %v840 = vpop.f32.mrb[0].mxu0
      %v841 = vadd.f32 %v748, %v840
      %v842 = vpop.f32.mrb[0].mxu0
      %v843 = vpop.f32.mrb[0].mxu0
      %v844 = vadd.f32 %v748, %v843
      %v845 = vpop.f32.mrb[0].mxu0
      %846 = vdwg.mxu0
      %v847 = vadd.f32 %v337, %v833
      %v848 = vadd.f32 %v338, %v836
      %v849 = vadd.f32 %v339, %v841
      %v850 = vadd.f32 %v340, %v844
      %vm851 = vcmask 261120
      %852 = vst.msk [vmem:[%s334] sm:$0xff] %vm851, %v847
      %853 = vst.msk [vmem:[%s334 + $0x8] sm:$0xff] %vm851, %v848
      %854 = vst.msk [vmem:[%s334 + $0x10] sm:$0xff] %vm851, %v849
      %855 = vst.msk [vmem:[%s334 + $0x18] sm:$0xff] %vm851, %v850
      %s856 = smul.u32 4, %s20
      %p857 = scmp.lt.s32.totalorder %s856, 7
      %s858 = scalar_select %p857, %s856, 7
      %s859 = smul.addr %s858, 8
      %s860 = scalar_lea.vmem %s9, %s859
      // Predicated region
      $region57: #{block_forward.1} parent=55 // pred_check
        %p861 = pneg %p232
      $region58: #{block_forward.1} parent=55 // pred_check_branch
        %863 = sbr.rel (%p861) target = $region60
      $region59: #{block_forward.1} parent=55 // pred_region
        %s864 = smul.u32 4, %s20
      $region60: #{block_forward.1} parent=55 // pred_fallthru
        _
    $region56: #{block_forward.1} parent=5 // pred_fallthru
      _
    %p865 = scmp.le.s32.totalorder 2, %s15
    // Predicated region
    $region61: #{block_forward.1} parent=5 // pred_check
      %p866 = pneg %p865
    $region62: #{block_forward.1} parent=5 // pred_check_branch
      %868 = sbr.rel (%p866) target = $region64
    $region63: #{block_forward.1} parent=5 // pred_region
      %s869 = ssub.s32 %s15, 2
      // Predicated region
      $region65: #{block_forward.1} parent=63 // pred_check
        %p870 = pneg %p238
      $region66: #{block_forward.1} parent=63 // pred_check_branch
        %872 = sbr.rel (%p870) target = $region68
      $region67: #{block_forward.1} parent=63 // pred_region
        %s873 = smul.u32 4, %s21
        %p874 = scmp.lt.s32.totalorder %s873, 7
        %s875 = scalar_select %p874, %s873, 7
        %s876 = smul.addr %s875, 8
        %s877 = scalar_lea.vmem %s9, %s876
      $region68: #{block_forward.1} parent=63 // pred_fallthru
        _
    $region64: #{block_forward.1} parent=5 // pred_fallthru
      _
  $region6: #{block_forward.1} parent=0 // loop_footer
    %s19 = sadd.s32 1, %s15
  $region7: #{block_forward.1} parent=0 // loop_footer_branch
    %14 = sbr.rel target = $region3
  $region8: #{block_forward.1} parent=0 // loop_exit
    _

</llo_original>
